<compile_context>
chip_gen: v7x
topology: tpu7x:2x2x1
jax: 0.10.0
libtpu: 0.0.40
codegen_flags: <defaults>
</compile_context>

<pallas_src>
import math
import jax
import jax.numpy as jnp
from jax import lax
from jax.experimental import pallas as pl
from jax.experimental.pallas import tpu as pltpu

EPS = 1e-12  # matches torch.nn.functional.normalize default eps


def _round_up(a, b):
    return (a + b - 1) // b * b


def _nn_classifier_kernel(x_ref, pnt_ref, o_ref):
    # x_ref   : VMEM [TB, D_pad]    f32  raw (un-normalized) feature tile
    # pnt_ref : VMEM [D_pad, C_pad] f32  temp-scaled, row-normalized prototypes^T (resident)
    # o_ref   : VMEM [TB, C_pad]    f32  logits tile
    x = x_ref[...]

    # Canonical [M,K] x [K,N] MXU matmul: class dim sits on lanes as the MXU N dim.
    s = jnp.dot(x, pnt_ref[...], preferred_element_type=jnp.float32)

    # rank-1 row scaling: 1 / max(||x||, EPS) via a single EUP rsqrt.
    # (temperature is already folded into pnt_ref, zero-padded D adds exact zeros)
    sumsq = jnp.sum(x * x, axis=-1, keepdims=True)          # [TB, 1]
    scale = lax.rsqrt(jnp.maximum(sumsq, EPS * EPS))

    o_ref[...] = (s * scale).astype(o_ref.dtype)


def nn_classifier_forward(x, proto, temp, *, block_b=512):
    """x: [B, in_dim], proto: [n_classes, in_dim], temp: scalar -> [B, n_classes]."""
    B, D = x.shape
    C, D2 = proto.shape
    assert D == D2

    x = x.astype(jnp.float32)
    proto = proto.astype(jnp.float32)

    # ---- one-time parameter prep (hoisted out of the per-tile loop) -------
    # normalize prototype rows and fold the scalar temperature into the weights:
    #   logits = (xn @ pn^T) * temp == xn @ (temp * pn)^T
    p_sumsq = jnp.sum(proto * proto, axis=-1, keepdims=True)
    pn = proto * lax.rsqrt(jnp.maximum(p_sumsq, EPS * EPS))
    pn = pn * jnp.asarray(temp, jnp.float32)

    # class-dim padding policy (see review): tiny C un-padded, large C 256-aligned.
    if C <= 128:
        c_pad = C
    elif C < 256:
        c_pad = 256
    else:
        c_pad = _round_up(C, 256)

    # contraction-dim padding: zeros are exact no-ops for the dot and for sumsq.
    d_pad = _round_up(D, 128)

    if c_pad != C or d_pad != D:
        pn = jnp.pad(pn, ((0, c_pad - C), (0, d_pad - D)))
    if d_pad != D:
        x = jnp.pad(x, ((0, 0), (0, d_pad - D)))

    pnt = pn.T  # [d_pad, c_pad] -- one-time XLA transpose, canonical MXU RHS layout

    # ---- B tiling ----------------------------------------------------------
    tb = max(8, min(block_b, _round_up(B, 8)))
    if B > 8:
        # keep at least 2 B-tiles so "parallel" can shard across v7x's 2 TensorCores.
        tb = min(tb, max(8, _round_up(pl.cdiv(B, 2), 8)))

    # shrink tile until the VMEM footprint fits a budget safe for v7x (64 MiB/TC).
    def footprint(tb_):
        # double-buffered x and out tiles + (conservatively) double-buffered proto
        return 4 * (2 * tb_ * d_pad + 2 * tb_ * c_pad + 2 * d_pad * c_pad)

    vmem_budget = 48 * 1024 * 1024
    while tb > 8 and footprint(tb) > vmem_budget:
        tb = max(8, _round_up(tb // 2, 8))
    # TODO(synk): if the resident prototypes alone exceed the budget
    # (2*d_pad*c_pad*4 > ~48 MiB, i.e. very large n_classes on v7x), add a
    # second grid axis over the class dim instead of keeping proto resident.

    n_tiles = pl.cdiv(B, tb)  # ragged last tile allowed; no extra HBM copy of x

    vmem_limit = int(min(max(footprint(tb) + (4 << 20), 32 << 20), 64 << 20))

    out = pl.pallas_call(
        _nn_classifier_kernel,
        out_shape=jax.ShapeDtypeStruct((B, c_pad), jnp.float32),
        grid=(n_tiles,),
        in_specs=[
            pl.BlockSpec((tb, d_pad), lambda i: (i, 0)),      # x B-tile
            pl.BlockSpec((d_pad, c_pad), lambda i: (0, 0)),   # proto^T (resident)
        ],
        out_specs=pl.BlockSpec((tb, c_pad), lambda i: (i, 0)),
        compiler_params=pltpu.CompilerParams(
            dimension_semantics=("parallel",),
            vmem_limit_bytes=vmem_limit,
        ),
    )(x, pnt)

    return out[:, :C]


def _reference(x, proto, temp):
    xn = x / jnp.maximum(jnp.linalg.norm(x, axis=-1, keepdims=True), EPS)
    pn = proto / jnp.maximum(jnp.linalg.norm(proto, axis=-1, keepdims=True), EPS)
    return (xn @ pn.T) * temp


if __name__ == "__main__":
    # Small shapes consistent with the module: feature dim 128, 8 classes, batch 8.
    B, in_dim, n_classes = 8, 128, 8

    key = jax.random.PRNGKey(0)
    kx, kp = jax.random.split(key)

    x = jax.random.normal(kx, (B, in_dim), dtype=jnp.float32)

    # kaiming_uniform_(a=sqrt(5)) on [n_classes, in_dim]:
    #   bound = sqrt(6 / ((1 + a^2) * fan_in)) = 1 / sqrt(fan_in)
    bound = 1.0 / math.sqrt(in_dim)
    proto = jax.random.uniform(
        kp, (n_classes, in_dim), dtype=jnp.float32, minval=-bound, maxval=bound
    )
    temp = jnp.float32(10.0)  # metric='cos' default temperature

    logits = nn_classifier_forward(x, proto, temp)
    jax.block_until_ready(logits)

    ref = _reference(x, proto, temp)
    assert logits.shape == (B, n_classes)
    assert jnp.allclose(logits, ref, atol=1e-4, rtol=1e-4)

    print("KERNEL_OK")
</pallas_src>

<mosaic_0001>
module attributes {stable_mosaic.version = 11 : i64} {
  func.func @_nn_classifier_kernel(%arg0: i32, %arg1: memref<8x128xf32, #tpu.memory_space<vmem>>, %arg2: memref<128x8xf32, #tpu.memory_space<vmem>>, %arg3: memref<8x8xf32, #tpu.memory_space<vmem>>) attributes {dimension_semantics = [#tpu.dimension_semantics<parallel>], iteration_bounds = array<i64: 1>, scalar_prefetch = 0 : i64, scratch_operands = 0 : i64, tpu.core_type = #tpu.core_type<tc>, window_params = [{transform_indices = @transform_0, window_bounds = array<i64: 8, 128>}, {pipeline_mode = #tpu.pipeline_mode<synchronous>, transform_indices = @transform_1, window_bounds = array<i64: 128, 8>}, {transform_indices = @transform_2, window_bounds = array<i64: 8, 8>}]} {
    %c0 = arith.constant 0 : index
    %c0_0 = arith.constant 0 : index
    %0 = vector.load %arg1[%c0, %c0_0] : memref<8x128xf32, #tpu.memory_space<vmem>>, vector<8x128xf32>
    %c0_1 = arith.constant 0 : index
    %c0_2 = arith.constant 0 : index
    %1 = vector.load %arg2[%c0_1, %c0_2] : memref<128x8xf32, #tpu.memory_space<vmem>>, vector<128x8xf32>
    %cst = arith.constant dense<0.000000e+00> : vector<8x8xf32>
    %2 = tpu.matmul %0, %1, %cst {dimension_numbers = #tpu.dot_dimension_numbers<[1], [0], [0], [1], [0, 0, 1, 1], [], []>} : vector<8x128xf32>, vector<128x8xf32>, vector<8x8xf32> -> vector<8x8xf32>
    %3 = arith.mulf %0, %0 : vector<8x128xf32>
    %cst_3 = arith.constant dense<0.000000e+00> : vector<8xf32>
    %4 = vector.multi_reduction <add>, %3, %cst_3 [1] : vector<8x128xf32> to vector<8xf32>
    %5 = vector.shape_cast %4 : vector<8xf32> to vector<8x1xf32>
    %cst_4 = arith.constant 1.000000e-24 : f32
    %6 = vector.broadcast %cst_4 : f32 to vector<8x1xf32>
    %7 = arith.maximumf %5, %6 : vector<8x1xf32>
    %8 = math.rsqrt %7 : vector<8x1xf32>
    %9 = vector.broadcast %8 : vector<8x1xf32> to vector<8x8xf32>
    %10 = arith.mulf %2, %9 : vector<8x8xf32>
    %c0_5 = arith.constant 0 : index
    %c0_6 = arith.constant 0 : index
    %11 = vector.load %arg3[%c0_5, %c0_6] : memref<8x8xf32, #tpu.memory_space<vmem>>, vector<8x8xf32>
    tpu.vector_store %arg3[%c0_5, %c0_6], %10 {strides = array<i32>} : memref<8x8xf32, #tpu.memory_space<vmem>>, vector<8x8xf32>,
    return
  }
  func.func @transform_0(%arg0: i32) -> (i32, i32) {
    %c0_i32 = arith.constant 0 : i32
    %c0_i32_0 = arith.constant 0 : i32
    return %arg0, %c0_i32 : i32, i32
  }
  func.func @transform_1(%arg0: i32) -> (i32, i32) {
    %c0_i32 = arith.constant 0 : i32
    %c0_i32_0 = arith.constant 0 : i32
    %c0_i32_1 = arith.constant 0 : i32
    return %c0_i32, %c0_i32_0 : i32, i32
  }
  func.func @transform_2(%arg0: i32) -> (i32, i32) {
    %c0_i32 = arith.constant 0 : i32
    %c0_i32_0 = arith.constant 0 : i32
    return %arg0, %c0_i32 : i32, i32
  }
}

</mosaic_0001>

<llo_original>
// kernel: tpu_custom_call.1
$region0: #{tpu_custom_call.1}
  #allocation0 [shape = 'u32[]', space=smem, size = 0x4, offset = 0x4, fixed_abs, tag = 'smem constant byte address 0x4 - core index']
  #allocation1 [shape = 'u32[144,128]{1,0:T(1,128)}', space=vmem, size = 0x12000, scoped, tag = 'internal scratch']
  %s0 = inlined_call_operand.vmem [shape: f32[8,128], index: 0, kind: input, shape index: {}]
  %s1 = inlined_call_operand.vmem [shape: f32[128,8], index: 1, kind: input, shape index: {}]
  %s2 = inlined_call_operand.hbm [shape: f32[8,8], index: 2, kind: output, shape index: {}]
  %s3 = sld [smem:[#allocation0]]
  $region18: #{tpu_custom_call.1} parent=0
    _
  %s5 = ssub.s32 1, %s3
  %s6 = scalar_select 0, %s5, %s3
  $region1: #{tpu_custom_call.1} parent=0
    #allocation2 [shape = 'u8[4096]{0}', space=vmem, size = 0x1000, scoped, tag = 'output window, operand 0, single buffered']
    #allocation3 [shape = 's32[1]{0}', space=sflag, size = 0x4, scoped, tag = 'scoped memory for tpu_custom_call.1']
    %7 = vsyncpa [#allocation3], 0
    // Predicated region
    $region2: #{tpu_custom_call.1} parent=1 // pred_check
      _
    $region3: #{tpu_custom_call.1} parent=1 // pred_check_branch
      %9 = sbr.rel (0) target = $region5
    $region4: #{tpu_custom_call.1} parent=1 // pred_region
      _
    $region5: #{tpu_custom_call.1} parent=1 // pred_fallthru
      _
    // Predicated region
    $region6: #{tpu_custom_call.1} parent=1 // pred_check
      _
    $region7: #{tpu_custom_call.1} parent=1 // pred_check_branch
      %11 = sbr.rel (0) target = $region9
    $region8: #{tpu_custom_call.1} parent=1 // pred_region
      _
    $region9: #{tpu_custom_call.1} parent=1 // pred_fallthru
      _
    %v12 = vld [vmem:[%s0] sm:$0xff]
    %v13 = vld [vmem:[%s1] sm:$0xff]
    %v14 = vld [vmem:[%s1 + $0x8] sm:$0xff]
    %v15 = vld [vmem:[%s1 + $0x10] sm:$0xff]
    %v16 = vld [vmem:[%s1 + $0x18] sm:$0xff]
    %v17 = vld [vmem:[%s1 + $0x20] sm:$0xff]
    %v18 = vld [vmem:[%s1 + $0x28] sm:$0xff]
    %v19 = vld [vmem:[%s1 + $0x30] sm:$0xff]
    %v20 = vld [vmem:[%s1 + $0x38] sm:$0xff]
    %v21 = vld [vmem:[%s1 + $0x40] sm:$0xff]
    %v22 = vld [vmem:[%s1 + $0x48] sm:$0xff]
    %v23 = vld [vmem:[%s1 + $0x50] sm:$0xff]
    %v24 = vld [vmem:[%s1 + $0x58] sm:$0xff]
    %v25 = vld [vmem:[%s1 + $0x60] sm:$0xff]
    %v26 = vld [vmem:[%s1 + $0x68] sm:$0xff]
    %v27 = vld [vmem:[%s1 + $0x70] sm:$0xff]
    %v28 = vld [vmem:[%s1 + $0x78] sm:$0xff]
    %29 = vmatprep.subr.mxu0 0.0
    %30 = vmatpush1.msra.mxu0 %v13
    %31 = vmatprep.subr.mxu0 0.0
    %32 = vmatpush1.msra.mxu0 %v14
    %33 = vmatprep.subr.mxu0 0.0
    %34 = vmatpush1.msra.mxu0 %v15
    %35 = vmatprep.subr.mxu0 0.0
    %36 = vmatpush1.msra.mxu0 %v16
    %37 = vmatprep.subr.mxu0 0.0
    %38 = vmatpush1.msra.mxu0 %v17
    %39 = vmatprep.subr.mxu0 0.0
    %40 = vmatpush1.msra.mxu0 %v18
    %41 = vmatprep.subr.mxu0 0.0
    %42 = vmatpush1.msra.mxu0 %v19
    %43 = vmatprep.subr.mxu0 0.0
    %44 = vmatpush1.msra.mxu0 %v20
    %45 = vmatprep.subr.mxu0 0.0
    %46 = vmatpush1.msra.mxu0 %v21
    %47 = vmatprep.subr.mxu0 0.0
    %48 = vmatpush1.msra.mxu0 %v22
    %49 = vmatprep.subr.mxu0 0.0
    %50 = vmatpush1.msra.mxu0 %v23
    %51 = vmatprep.subr.mxu0 0.0
    %52 = vmatpush1.msra.mxu0 %v24
    %53 = vmatprep.subr.mxu0 0.0
    %54 = vmatpush1.msra.mxu0 %v25
    %55 = vmatprep.subr.mxu0 0.0
    %56 = vmatpush1.msra.mxu0 %v26
    %57 = vmatprep.subr.mxu0 0.0
    %58 = vmatpush1.msra.mxu0 %v27
    %59 = vmatprep.subr.mxu0 0.0
    %60 = vmatpush1.msra.mxu0 %v28
    %61 = vmatprep.subr.mxu0 0.0
    %62 = vmatpush1.msra.mxu0 0.0
    %63 = vmatprep.subr.mxu0 0.0
    %64 = vmatpush1.msra.mxu0 0.0
    %65 = vmatprep.subr.mxu0 0.0
    %66 = vmatpush1.msra.mxu0 0.0
    %67 = vmatprep.subr.mxu0 0.0
    %68 = vmatpush1.msra.mxu0 0.0
    %69 = vmatprep.subr.mxu0 0.0
    %70 = vmatpush1.msra.mxu0 0.0
    %71 = vmatprep.subr.mxu0 0.0
    %72 = vmatpush1.msra.mxu0 0.0
    %73 = vmatprep.subr.mxu0 0.0
    %74 = vmatpush1.msra.mxu0 0.0
    %75 = vmatprep.subr.mxu0 0.0
    %76 = vmatpush1.msra.mxu0 0.0
    %77 = vmatprep.subr.mxu0 0.0
    %78 = vmatpush1.msra.mxu0 0.0
    %79 = vmatprep.subr.mxu0 0.0
    %80 = vmatpush1.msra.mxu0 0.0
    %81 = vmatprep.subr.mxu0 0.0
    %82 = vmatpush1.msra.mxu0 0.0
    %83 = vmatprep.subr.mxu0 0.0
    %84 = vmatpush1.msra.mxu0 0.0
    %85 = vmatprep.subr.mxu0 0.0
    %86 = vmatpush1.msra.mxu0 0.0
    %87 = vmatprep.subr.mxu0 0.0
    %88 = vmatpush1.msra.mxu0 0.0
    %89 = vmatprep.subr.mxu0 0.0
    %90 = vmatpush1.msra.mxu0 0.0
    %91 = vmatprep.subr.mxu0 0.0
    %92 = vmatpush1.msra.mxu0 0.0
    %93 = vmatprep.mubr.f32.mxu0 0.0
    %94 = vmatmul.mubr.f32.gmra.mrb[0].mxu0 %v12
    %v95 = vpop.f32.mrb[0].mxu0
    %v96 = vadd.f32 0.0, %v95
    %v97 = vpop.f32.mrb[0].mxu0
    %98 = vdwg.mxu0
    %v99 = vmul.f32 %v12, %v12
    %100 = vadd.xlane.f32.xlu0 %v99
    %v101 = vpop.xlane.xlu0 %100
    %v102 = vmax.f32 %v101, 1e-24
    %v103 = vrsqrt.pop %v102
    %v104 = vmul.f32 %v96, %v103
    %vm105 = vcmask 64512
    %106 = vst.msk [vmem:[#allocation2] sm:$0xff] %vm105, %v104
    // Predicated region
    $region10: #{tpu_custom_call.1} parent=1 // pred_check
      _
    $region11: #{tpu_custom_call.1} parent=1 // pred_check_branch
      %108 = sbr.rel (0) target = $region13
    $region12: #{tpu_custom_call.1} parent=1 // pred_region
      %s110 = ssub.s32 128, 128
      %111 = vsyncadd [#allocation3], %s110
      %s113 = sshll.u32 [#allocation2], 4
      %s114 = int_to_ptr.vmem [resolvable:$true] %s113
      %116 = dma.vmem_to_hbm [thread:$0]  %s114, 128, %s2, [#allocation3]
    $region13: #{tpu_custom_call.1} parent=1 // pred_fallthru
      _
    // Predicated region
    $region14: #{tpu_custom_call.1} parent=1 // pred_check
      _
    $region15: #{tpu_custom_call.1} parent=1 // pred_check_branch
      %118 = sbr.rel (0) target = $region17
    $region16: #{tpu_custom_call.1} parent=1 // pred_region
      %119 = dma.done [#allocation3], 128
    $region17: #{tpu_custom_call.1} parent=1 // pred_fallthru
      _
    %120 = vsyncpa [#allocation3], 1

</llo_original>
